<compile_context>
chip_gen: v7x
topology: tpu7x:2x2x1
jax: 0.10.0
libtpu: 0.0.40
codegen_flags: <defaults>
</compile_context>

<pallas_src>
import math
import functools

import jax
import jax.numpy as jnp
from jax.experimental import pallas as pl
from jax.experimental.pallas import tpu as pltpu


def _cdiv(a, b):
    return (a + b - 1) // b


def _round_up(x, m):
    return _cdiv(x, m) * m


def _pick_tile(dim, cap, mult):
    """Tile size (multiple of `mult`, <= cap) minimizing padding of `dim`."""
    dim_r = _round_up(dim, mult)
    n_tiles = max(1, _cdiv(dim_r, cap))
    t = _round_up(_cdiv(dim_r, n_tiles), mult)
    return t, _round_up(dim_r, t)


def _pad2(a, rows, cols):
    """Zero-pad a 2-D array to (rows, cols); no-op (no copy) if already sized."""
    if a.shape == (rows, cols):
        return a
    return jnp.zeros((rows, cols), a.dtype).at[: a.shape[0], : a.shape[1]].set(a)


def _hw_caps():
    """(tm_cap, tk_cap, tn_cap, vmem_limit_bytes), generation-aware."""
    vmem = None
    try:
        info_fn = getattr(pltpu, "get_tpu_info", None)
        if info_fn is not None:
            vmem = getattr(info_fn(), "vmem_capacity_bytes", None)
    except Exception:
        vmem = None
    if vmem is not None and vmem >= 100 * 1024 * 1024:   # v5e / v6e (128 MiB VMEM)
        return 512, 2048, 1024, 96 * 1024 * 1024
    # unknown or v7x (64 MiB physical VMEM): stay conservative
    return 512, 1024, 512, 48 * 1024 * 1024


# ---------------------------------------------------------------------------
# Kernels
# ---------------------------------------------------------------------------
def _noisy_kernel(x_ref, wmu_ref, wsig_ref, ein_ref, eout_ref, b_ref,
                  o_ref, *acc, dot_dtype):
    # If no scratch was allocated, the f32 output block itself is the
    # accumulator (it stays resident across the K axis: out index_map ignores k).
    acc_ref = acc[0] if acc else o_ref
    k = pl.program_id(2)

    @pl.when(k == 0)
    def _():
        acc_ref[...] = jnp.broadcast_to(b_ref[...], acc_ref.shape).astype(acc_ref.dtype)

    x = x_ref[...]
    xn = x * ein_ref[...]                 # eps_in applied along K (columns of x)
    wmu = wmu_ref[...]
    wsig = wsig_ref[...]
    if dot_dtype is not None:
        x, xn = x.astype(dot_dtype), xn.astype(dot_dtype)
        wmu, wsig = wmu.astype(dot_dtype), wsig.astype(dot_dtype)

    acc_ref[...] += (
        jnp.dot(x, wmu, preferred_element_type=jnp.float32)
        + eout_ref[...] * jnp.dot(xn, wsig, preferred_element_type=jnp.float32))

    if acc:  # low-precision output: cast/copy once at the end of the K loop
        @pl.when(k == pl.num_programs(2) - 1)
        def _():
            o_ref[...] = acc_ref[...].astype(o_ref.dtype)


def _mu_kernel(x_ref, wmu_ref, b_ref, o_ref, *acc, dot_dtype):
    acc_ref = acc[0] if acc else o_ref
    k = pl.program_id(2)

    @pl.when(k == 0)
    def _():
        acc_ref[...] = jnp.broadcast_to(b_ref[...], acc_ref.shape).astype(acc_ref.dtype)

    x = x_ref[...]
    w = wmu_ref[...]
    if dot_dtype is not None:
        x = x.astype(dot_dtype)
        w = w.astype(dot_dtype)
    acc_ref[...] += jnp.dot(x, w, preferred_element_type=jnp.float32)

    if acc:
        @pl.when(k == pl.num_programs(2) - 1)
        def _():
            o_ref[...] = acc_ref[...].astype(o_ref.dtype)


# ---------------------------------------------------------------------------
# Wrapper
# ---------------------------------------------------------------------------
@functools.partial(jax.jit, static_argnames=("training", "dot_dtype"))
def noisy_linear_forward(x, weight_mu_t, weight_sigma_t, eps_in, eps_out,
                         bias_mu, bias_sigma, *, training=True,
                         dot_dtype=jnp.bfloat16):
    """NoisyLinear forward.

    x:              [batch, in_features]
    weight_mu_t:    [in_features, out_features]  (pre-transposed at init)
    weight_sigma_t: [in_features, out_features]
    eps_in:         [in_features]   (weight_epsilon == eps_out ⊗ eps_in)
    eps_out:        [out_features]  (== bias_epsilon)
    bias_mu:        [out_features]
    bias_sigma:     [out_features]
    """
    batch, in_features = x.shape
    kf, out_features = weight_mu_t.shape
    assert kf == in_features
    dt = x.dtype

    tm_cap, tk_cap, tn_cap, vmem_limit = _hw_caps()
    m_mult = max(8, 32 // dt.itemsize)           # 8 f32, 16 bf16, 32 int8
    tm, Mp = _pick_tile(batch, tm_cap, m_mult)
    tk, Kp = _pick_tile(in_features, tk_cap, 128)
    tn, Np = _pick_tile(out_features, tn_cap, 128)

    # Dual-TC parts (v7x) need >= 2 "parallel" tiles; split N when it is free.
    if (Mp // tm) * (Np // tn) < 2 and tn % 256 == 0:
        tn //= 2

    # TODO(synk): in production, store weight_mu_t/weight_sigma_t pre-padded to
    # 128-multiples in both dims at init so these pads are always no-ops.
    xp = _pad2(x, Mp, Kp)
    wmu_p = _pad2(weight_mu_t.astype(dt), Kp, Np)
    b_eff = bias_mu + bias_sigma * eps_out if training else bias_mu
    b_p = _pad2(b_eff.astype(jnp.float32).reshape(1, -1), 1, Np)

    grid = (Mp // tm, Np // tn, Kp // tk)
    x_spec = pl.BlockSpec((tm, tk), lambda i, j, k: (i, k))
    w_spec = pl.BlockSpec((tk, tn), lambda i, j, k: (k, j))
    krow_spec = pl.BlockSpec((1, tk), lambda i, j, k: (0, k))   # eps_in row
    nrow_spec = pl.BlockSpec((1, tn), lambda i, j, k: (0, j))   # eps_out / bias row
    out_spec = pl.BlockSpec((tm, tn), lambda i, j, k: (i, j))

    needs_scratch = dt != jnp.float32
    scratch = [pltpu.VMEM((tm, tn), jnp.float32)] if needs_scratch else []
    cparams = pltpu.CompilerParams(
        dimension_semantics=("parallel", "parallel", "arbitrary"),
        vmem_limit_bytes=vmem_limit)
    out_shape = jax.ShapeDtypeStruct((Mp, Np), dt)

    if training:
        wsig_p = _pad2(weight_sigma_t.astype(dt), Kp, Np)
        ein_p = _pad2(eps_in.astype(dt).reshape(1, -1), 1, Kp)
        eout_p = _pad2(eps_out.astype(jnp.float32).reshape(1, -1), 1, Np)
        yp = pl.pallas_call(
            functools.partial(_noisy_kernel, dot_dtype=dot_dtype),
            out_shape=out_shape,
            grid_spec=pltpu.PrefetchScalarGridSpec(
                num_scalar_prefetch=0, grid=grid,
                in_specs=[x_spec, w_spec, w_spec, krow_spec, nrow_spec, nrow_spec],
                out_specs=out_spec, scratch_shapes=scratch),
            compiler_params=cparams,
        )(xp, wmu_p, wsig_p, ein_p, eout_p, b_p)
    else:
        yp = pl.pallas_call(
            functools.partial(_mu_kernel, dot_dtype=dot_dtype),
            out_shape=out_shape,
            grid_spec=pltpu.PrefetchScalarGridSpec(
                num_scalar_prefetch=0, grid=grid,
                in_specs=[x_spec, w_spec, nrow_spec],
                out_specs=out_spec, scratch_shapes=scratch),
            compiler_params=cparams,
        )(xp, wmu_p, b_p)

    if (Mp, Np) != (batch, out_features):
        yp = yp[:batch, :out_features]
    return yp


# ---------------------------------------------------------------------------
# Parameter / noise initialization mirroring the PyTorch module.  Weights are
# kept pre-transposed ([in, out]) so the kernel never transposes per call.
# Noise stays factorized: weight_epsilon == eps_out ⊗ eps_in, bias_epsilon == eps_out.
# ---------------------------------------------------------------------------
def init_noisy_linear(key, in_features, out_features, std_init=0.4,
                      dtype=jnp.float32):
    k_wmu, k_bmu, k_ein, k_eout = jax.random.split(key, 4)
    mu_range = 1.0 / math.sqrt(in_features)

    weight_mu_t = jax.random.uniform(
        k_wmu, (in_features, out_features), dtype, -mu_range, mu_range)
    weight_sigma_t = jnp.full((in_features, out_features),
                              std_init / math.sqrt(in_features), dtype)
    bias_mu = jax.random.uniform(
        k_bmu, (out_features,), dtype, -mu_range, mu_range)
    bias_sigma = jnp.full((out_features,),
                          std_init / math.sqrt(out_features), dtype)

    def scale_noise(k, size):
        v = jax.random.normal(k, (size,), dtype)
        return jnp.sign(v) * jnp.sqrt(jnp.abs(v))

    eps_in = scale_noise(k_ein, in_features)
    eps_out = scale_noise(k_eout, out_features)

    return dict(weight_mu_t=weight_mu_t, weight_sigma_t=weight_sigma_t,
                bias_mu=bias_mu, bias_sigma=bias_sigma,
                eps_in=eps_in, eps_out=eps_out)


if __name__ == "__main__":
    key = jax.random.PRNGKey(0)
    k_param, k_x = jax.random.split(key)

    batch, in_features, out_features = 8, 32, 64
    params = init_noisy_linear(k_param, in_features, out_features, std_init=0.4)
    x = jax.random.normal(k_x, (batch, in_features), jnp.float32)

    args = (x, params["weight_mu_t"], params["weight_sigma_t"],
            params["eps_in"], params["eps_out"],
            params["bias_mu"], params["bias_sigma"])

    # Pure-JAX reference (materializes weight_epsilon only for checking).
    w_t_ref = params["weight_mu_t"] + params["weight_sigma_t"] * jnp.outer(
        params["eps_in"], params["eps_out"])
    b_ref = params["bias_mu"] + params["bias_sigma"] * params["eps_out"]
    y_ref = x @ w_t_ref + b_ref

    # Training-mode forward, exact f32 MXU path.
    y32 = jax.block_until_ready(
        noisy_linear_forward(*args, training=True, dot_dtype=None))
    assert y32.shape == (batch, out_features)
    assert jnp.allclose(y32, y_ref, atol=1e-5, rtol=1e-5)

    # Training-mode forward, default bf16-MXU path (looser tolerance).
    ybf = jax.block_until_ready(noisy_linear_forward(*args, training=True))
    assert jnp.allclose(ybf, y_ref, atol=5e-2, rtol=5e-2)

    # Eval-mode forward (mu only).
    y_eval = jax.block_until_ready(
        noisy_linear_forward(*args, training=False, dot_dtype=None))
    y_eval_ref = x @ params["weight_mu_t"] + params["bias_mu"]
    assert jnp.allclose(y_eval, y_eval_ref, atol=1e-5, rtol=1e-5)

    print("KERNEL_OK")
</pallas_src>

<mosaic_0001>
module attributes {stable_mosaic.version = 11 : i64} {
  func.func @_noisy_kernel(%arg0: i32, %arg1: i32, %arg2: i32, %arg3: memref<8x128xf32, #tpu.memory_space<vmem>>, %arg4: memref<128x128xf32, #tpu.memory_space<vmem>>, %arg5: memref<128x128xf32, #tpu.memory_space<vmem>>, %arg6: memref<1x128xf32, #tpu.memory_space<vmem>>, %arg7: memref<1x128xf32, #tpu.memory_space<vmem>>, %arg8: memref<1x128xf32, #tpu.memory_space<vmem>>, %arg9: memref<8x128xf32, #tpu.memory_space<vmem>>) attributes {dimension_semantics = [#tpu.dimension_semantics<parallel>, #tpu.dimension_semantics<parallel>, #tpu.dimension_semantics<arbitrary>], iteration_bounds = array<i64: 1, 1, 1>, scalar_prefetch = 0 : i64, scratch_operands = 0 : i64, tpu.core_type = #tpu.core_type<tc>, window_params = [{transform_indices = @transform_0, window_bounds = array<i64: 8, 128>}, {transform_indices = @transform_1, window_bounds = array<i64: 128, 128>}, {transform_indices = @transform_2, window_bounds = array<i64: 128, 128>}, {transform_indices = @transform_3, window_bounds = array<i64: 1, 128>}, {transform_indices = @transform_4, window_bounds = array<i64: 1, 128>}, {transform_indices = @transform_5, window_bounds = array<i64: 1, 128>}, {transform_indices = @transform_6, window_bounds = array<i64: 8, 128>}]} {
    %c0_i32 = arith.constant 0 : i32
    %0 = arith.cmpi eq, %arg2, %c0_i32 : i32
    %1 = arith.extui %0 : i1 to i32
    %c0_i32_0 = arith.constant 0 : i32
    %2 = arith.cmpi ne, %1, %c0_i32_0 : i32
    scf.if %2 {
      %c0_15 = arith.constant 0 : index
      %c0_16 = arith.constant 0 : index
      %18 = vector.load %arg8[%c0_15, %c0_16] : memref<1x128xf32, #tpu.memory_space<vmem>>, vector<1x128xf32>
      %19 = vector.shape_cast %18 : vector<1x128xf32> to vector<1x128xf32>
      %20 = vector.broadcast %19 : vector<1x128xf32> to vector<8x128xf32>
      %c0_17 = arith.constant 0 : index
      %c0_18 = arith.constant 0 : index
      %21 = vector.load %arg9[%c0_17, %c0_18] : memref<8x128xf32, #tpu.memory_space<vmem>>, vector<8x128xf32>
      tpu.vector_store %arg9[%c0_17, %c0_18], %20 {strides = array<i32>} : memref<8x128xf32, #tpu.memory_space<vmem>>, vector<8x128xf32>,
    } else {
    }
    %c0 = arith.constant 0 : index
    %c0_1 = arith.constant 0 : index
    %3 = vector.load %arg3[%c0, %c0_1] : memref<8x128xf32, #tpu.memory_space<vmem>>, vector<8x128xf32>
    %c0_2 = arith.constant 0 : index
    %c0_3 = arith.constant 0 : index
    %4 = vector.load %arg6[%c0_2, %c0_3] : memref<1x128xf32, #tpu.memory_space<vmem>>, vector<1x128xf32>
    %5 = vector.broadcast %4 : vector<1x128xf32> to vector<8x128xf32>
    %6 = arith.mulf %3, %5 : vector<8x128xf32>
    %c0_4 = arith.constant 0 : index
    %c0_5 = arith.constant 0 : index
    %7 = vector.load %arg4[%c0_4, %c0_5] : memref<128x128xf32, #tpu.memory_space<vmem>>, vector<128x128xf32>
    %c0_6 = arith.constant 0 : index
    %c0_7 = arith.constant 0 : index
    %8 = vector.load %arg5[%c0_6, %c0_7] : memref<128x128xf32, #tpu.memory_space<vmem>>, vector<128x128xf32>
    %c0_8 = arith.constant 0 : index
    %c0_9 = arith.constant 0 : index
    %9 = vector.load %arg9[%c0_8, %c0_9] : memref<8x128xf32, #tpu.memory_space<vmem>>, vector<8x128xf32>
    %cst = arith.constant dense<0.000000e+00> : vector<8x128xf32>
    %10 = tpu.matmul %3, %7, %cst {dimension_numbers = #tpu.dot_dimension_numbers<[1], [0], [0], [1], [0, 0, 1, 1], [], []>} : vector<8x128xf32>, vector<128x128xf32>, vector<8x128xf32> -> vector<8x128xf32>
    %c0_10 = arith.constant 0 : index
    %c0_11 = arith.constant 0 : index
    %11 = vector.load %arg7[%c0_10, %c0_11] : memref<1x128xf32, #tpu.memory_space<vmem>>, vector<1x128xf32>
    %cst_12 = arith.constant dense<0.000000e+00> : vector<8x128xf32>
    %12 = tpu.matmul %6, %8, %cst_12 {dimension_numbers = #tpu.dot_dimension_numbers<[1], [0], [0], [1], [0, 0, 1, 1], [], []>} : vector<8x128xf32>, vector<128x128xf32>, vector<8x128xf32> -> vector<8x128xf32>
    %13 = vector.broadcast %11 : vector<1x128xf32> to vector<8x128xf32>
    %14 = arith.mulf %13, %12 : vector<8x128xf32>
    %15 = arith.addf %10, %14 : vector<8x128xf32>
    %16 = arith.addf %9, %15 : vector<8x128xf32>
    %c0_13 = arith.constant 0 : index
    %c0_14 = arith.constant 0 : index
    %17 = vector.load %arg9[%c0_13, %c0_14] : memref<8x128xf32, #tpu.memory_space<vmem>>, vector<8x128xf32>
    tpu.vector_store %arg9[%c0_13, %c0_14], %16 {strides = array<i32>} : memref<8x128xf32, #tpu.memory_space<vmem>>, vector<8x128xf32>,
    return
  }
  func.func @transform_0(%arg0: i32, %arg1: i32, %arg2: i32) -> (i32, i32) {
    %c0_i32 = arith.constant 0 : i32
    return %arg0, %arg2 : i32, i32
  }
  func.func @transform_1(%arg0: i32, %arg1: i32, %arg2: i32) -> (i32, i32) {
    %c0_i32 = arith.constant 0 : i32
    return %arg2, %arg1 : i32, i32
  }
  func.func @transform_2(%arg0: i32, %arg1: i32, %arg2: i32) -> (i32, i32) {
    %c0_i32 = arith.constant 0 : i32
    return %arg2, %arg1 : i32, i32
  }
  func.func @transform_3(%arg0: i32, %arg1: i32, %arg2: i32) -> (i32, i32) {
    %c0_i32 = arith.constant 0 : i32
    %c0_i32_0 = arith.constant 0 : i32
    return %c0_i32, %arg2 : i32, i32
  }
  func.func @transform_4(%arg0: i32, %arg1: i32, %arg2: i32) -> (i32, i32) {
    %c0_i32 = arith.constant 0 : i32
    %c0_i32_0 = arith.constant 0 : i32
    return %c0_i32, %arg1 : i32, i32
  }
  func.func @transform_5(%arg0: i32, %arg1: i32, %arg2: i32) -> (i32, i32) {
    %c0_i32 = arith.constant 0 : i32
    %c0_i32_0 = arith.constant 0 : i32
    return %c0_i32, %arg1 : i32, i32
  }
  func.func @transform_6(%arg0: i32, %arg1: i32, %arg2: i32) -> (i32, i32) {
    %c0_i32 = arith.constant 0 : i32
    return %arg0, %arg1 : i32, i32
  }
}

</mosaic_0001>

<llo_original>
// kernel: noisy_linear_forward.1
$region0: #{noisy_linear_forward.1}
  #allocation0 [shape = 'u32[]', space=smem, size = 0x4, offset = 0x4, fixed_abs, tag = 'smem constant byte address 0x4 - core index']
  #allocation1 [shape = 'u32[144,128]{1,0:T(1,128)}', space=vmem, size = 0x12000, scoped, tag = 'internal scratch']
  %s0 = inlined_call_operand.vmem [shape: f32[8,128], index: 0, kind: input, shape index: {}]
  %s1 = inlined_call_operand.vmem [shape: f32[128,128], index: 1, kind: input, shape index: {}]
  %s2 = inlined_call_operand.vmem [shape: f32[128,128], index: 2, kind: input, shape index: {}]
  %s3 = inlined_call_operand.vmem [shape: f32[1,128], index: 3, kind: input, shape index: {}]
  %s4 = inlined_call_operand.vmem [shape: f32[1,128], index: 4, kind: input, shape index: {}]
  %s5 = inlined_call_operand.vmem [shape: f32[1,128], index: 5, kind: input, shape index: {}]
  %s6 = inlined_call_operand.hbm [shape: f32[8,128], index: 6, kind: output, shape index: {}]
  %s7 = sld [smem:[#allocation0]]
  $region38: #{noisy_linear_forward.1} parent=0
    _
  %s9 = ssub.s32 1, %s7
  %s10 = scalar_select 0, %s9, %s7
  $region1: #{noisy_linear_forward.1} parent=0
    #allocation2 [shape = 'u8[4096]{0}', space=vmem, size = 0x1000, scoped, tag = 'output window, operand 0, single buffered']
    #allocation3 [shape = 's32[1]{0}', space=sflag, size = 0x4, scoped, tag = 'scoped memory for noisy_linear_forward.1']
    %11 = vsyncpa [#allocation3], 0
    // Predicated region
    $region2: #{noisy_linear_forward.1} parent=1 // pred_check
      _
    $region3: #{noisy_linear_forward.1} parent=1 // pred_check_branch
      %13 = sbr.rel (0) target = $region5
    $region4: #{noisy_linear_forward.1} parent=1 // pred_region
      _
    $region5: #{noisy_linear_forward.1} parent=1 // pred_fallthru
      _
    // Predicated region
    $region6: #{noisy_linear_forward.1} parent=1 // pred_check
      _
    $region7: #{noisy_linear_forward.1} parent=1 // pred_check_branch
      %15 = sbr.rel (0) target = $region9
    $region8: #{noisy_linear_forward.1} parent=1 // pred_region
      _
    $region9: #{noisy_linear_forward.1} parent=1 // pred_fallthru
      _
    // Predicated region
    $region10: #{noisy_linear_forward.1} parent=1 // pred_check
      _
    $region11: #{noisy_linear_forward.1} parent=1 // pred_check_branch
      %17 = sbr.rel (0) target = $region13
    $region12: #{noisy_linear_forward.1} parent=1 // pred_region
      _
    $region13: #{noisy_linear_forward.1} parent=1 // pred_fallthru
      _
    // Predicated region
    $region14: #{noisy_linear_forward.1} parent=1 // pred_check
      _
    $region15: #{noisy_linear_forward.1} parent=1 // pred_check_branch
      %19 = sbr.rel (0) target = $region17
    $region16: #{noisy_linear_forward.1} parent=1 // pred_region
      _
    $region17: #{noisy_linear_forward.1} parent=1 // pred_fallthru
      _
    // Predicated region
    $region18: #{noisy_linear_forward.1} parent=1 // pred_check
      _
    $region19: #{noisy_linear_forward.1} parent=1 // pred_check_branch
      %21 = sbr.rel (0) target = $region21
    $region20: #{noisy_linear_forward.1} parent=1 // pred_region
      _
    $region21: #{noisy_linear_forward.1} parent=1 // pred_fallthru
      _
    // Predicated region
    $region22: #{noisy_linear_forward.1} parent=1 // pred_check
      _
    $region23: #{noisy_linear_forward.1} parent=1 // pred_check_branch
      %23 = sbr.rel (0) target = $region25
    $region24: #{noisy_linear_forward.1} parent=1 // pred_region
      _
    $region25: #{noisy_linear_forward.1} parent=1 // pred_fallthru
      _
    %p24 = scmp.eq.s32.totalorder 0, 0
    // Predicated region
    $region26: #{noisy_linear_forward.1} parent=1 // pred_check
      %p25 = pneg %p24
    $region27: #{noisy_linear_forward.1} parent=1 // pred_check_branch
      %27 = sbr.rel (%p25) target = $region29
    $region28: #{noisy_linear_forward.1} parent=1 // pred_region
      %v28 = vld [vmem:[%s5] sm:$0x1]
      %v30 = vlaneseq
      %v31 = vshrl.u32 %v30, 7
      %v32 = vsub.s32 0, %v31
      %v33 = vrot.slane %v28, %v32
      %35 = vst [vmem:[#allocation2] sm:$0xff] %v33
    $region29: #{noisy_linear_forward.1} parent=1 // pred_fallthru
      _
    %v36 = vld [vmem:[%s0] sm:$0xff]
    %v37 = vld [vmem:[%s3] sm:$0x1]
    %v39 = vlaneseq
    %v40 = vshrl.u32 %v39, 7
    %v41 = vsub.s32 0, %v40
    %v42 = vrot.slane %v37, %v41
    %v44 = vmul.f32 %v36, %v42
    %v45 = vld [vmem:[%s1] sm:$0xff]
    %v46 = vld [vmem:[%s1 + $0x8] sm:$0xff]
    %v47 = vld [vmem:[%s1 + $0x10] sm:$0xff]
    %v48 = vld [vmem:[%s1 + $0x18] sm:$0xff]
    %v49 = vld [vmem:[%s1 + $0x20] sm:$0xff]
    %v50 = vld [vmem:[%s1 + $0x28] sm:$0xff]
    %v51 = vld [vmem:[%s1 + $0x30] sm:$0xff]
    %v52 = vld [vmem:[%s1 + $0x38] sm:$0xff]
    %v53 = vld [vmem:[%s1 + $0x40] sm:$0xff]
    %v54 = vld [vmem:[%s1 + $0x48] sm:$0xff]
    %v55 = vld [vmem:[%s1 + $0x50] sm:$0xff]
    %v56 = vld [vmem:[%s1 + $0x58] sm:$0xff]
    %v57 = vld [vmem:[%s1 + $0x60] sm:$0xff]
    %v58 = vld [vmem:[%s1 + $0x68] sm:$0xff]
    %v59 = vld [vmem:[%s1 + $0x70] sm:$0xff]
    %v60 = vld [vmem:[%s1 + $0x78] sm:$0xff]
    %v61 = vld [vmem:[%s2] sm:$0xff]
    %v62 = vld [vmem:[%s2 + $0x8] sm:$0xff]
    %v63 = vld [vmem:[%s2 + $0x10] sm:$0xff]
    %v64 = vld [vmem:[%s2 + $0x18] sm:$0xff]
    %v65 = vld [vmem:[%s2 + $0x20] sm:$0xff]
    %v66 = vld [vmem:[%s2 + $0x28] sm:$0xff]
    %v67 = vld [vmem:[%s2 + $0x30] sm:$0xff]
    %v68 = vld [vmem:[%s2 + $0x38] sm:$0xff]
    %v69 = vld [vmem:[%s2 + $0x40] sm:$0xff]
    %v70 = vld [vmem:[%s2 + $0x48] sm:$0xff]
    %v71 = vld [vmem:[%s2 + $0x50] sm:$0xff]
    %v72 = vld [vmem:[%s2 + $0x58] sm:$0xff]
    %v73 = vld [vmem:[%s2 + $0x60] sm:$0xff]
    %v74 = vld [vmem:[%s2 + $0x68] sm:$0xff]
    %v75 = vld [vmem:[%s2 + $0x70] sm:$0xff]
    %v76 = vld [vmem:[%s2 + $0x78] sm:$0xff]
    %v77 = vld [vmem:[#allocation2] sm:$0xff]
    %v78 = vld [vmem:[%s4] sm:$0x1]
    %79 = vmatprep.subr.mxu0 0.0
    %80 = vmatpush1.msra.mxu0 %v61
    %81 = vmatprep.subr.mxu0 0.0
    %82 = vmatpush1.msra.mxu0 %v62
    %83 = vmatprep.subr.mxu0 0.0
    %84 = vmatpush1.msra.mxu0 %v63
    %85 = vmatprep.subr.mxu0 0.0
    %86 = vmatpush1.msra.mxu0 %v64
    %87 = vmatprep.subr.mxu0 0.0
    %88 = vmatpush1.msra.mxu0 %v65
    %89 = vmatprep.subr.mxu0 0.0
    %90 = vmatpush1.msra.mxu0 %v66
    %91 = vmatprep.subr.mxu0 0.0
    %92 = vmatpush1.msra.mxu0 %v67
    %93 = vmatprep.subr.mxu0 0.0
    %94 = vmatpush1.msra.mxu0 %v68
    %95 = vmatprep.subr.mxu0 0.0
    %96 = vmatpush1.msra.mxu0 %v69
    %97 = vmatprep.subr.mxu0 0.0
    %98 = vmatpush1.msra.mxu0 %v70
    %99 = vmatprep.subr.mxu0 0.0
    %100 = vmatpush1.msra.mxu0 %v71
    %101 = vmatprep.subr.mxu0 0.0
    %102 = vmatpush1.msra.mxu0 %v72
    %103 = vmatprep.subr.mxu0 0.0
    %104 = vmatpush1.msra.mxu0 %v73
    %105 = vmatprep.subr.mxu0 0.0
    %106 = vmatpush1.msra.mxu0 %v74
    %107 = vmatprep.subr.mxu0 0.0
    %108 = vmatpush1.msra.mxu0 %v75
    %109 = vmatprep.subr.mxu0 0.0
    %110 = vmatpush1.msra.mxu0 %v76
    %111 = vmatprep.subr.mxu0 0.0
    %112 = vmatpush1.msra.mxu0 0.0
    %113 = vmatprep.subr.mxu0 0.0
    %114 = vmatpush1.msra.mxu0 0.0
    %115 = vmatprep.subr.mxu0 0.0
    %116 = vmatpush1.msra.mxu0 0.0
    %117 = vmatprep.subr.mxu0 0.0
    %118 = vmatpush1.msra.mxu0 0.0
    %119 = vmatprep.subr.mxu0 0.0
    %120 = vmatpush1.msra.mxu0 0.0
    %121 = vmatprep.subr.mxu0 0.0
    %122 = vmatpush1.msra.mxu0 0.0
    %123 = vmatprep.subr.mxu0 0.0
    %124 = vmatpush1.msra.mxu0 0.0
    %125 = vmatprep.subr.mxu0 0.0
    %126 = vmatpush1.msra.mxu0 0.0
    %127 = vmatprep.subr.mxu0 0.0
    %128 = vmatpush1.msra.mxu0 0.0
    %129 = vmatprep.subr.mxu0 0.0
    %130 = vmatpush1.msra.mxu0 0.0
    %131 = vmatprep.subr.mxu0 0.0
    %132 = vmatpush1.msra.mxu0 0.0
    %133 = vmatprep.subr.mxu0 0.0
    %134 = vmatpush1.msra.mxu0 0.0
    %135 = vmatprep.subr.mxu0 0.0
    %136 = vmatpush1.msra.mxu0 0.0
    %137 = vmatprep.subr.mxu0 0.0
    %138 = vmatpush1.msra.mxu0 0.0
    %139 = vmatprep.subr.mxu0 0.0
    %140 = vmatpush1.msra.mxu0 0.0
    %141 = vmatprep.subr.mxu0 0.0
    %142 = vmatpush1.msra.mxu0 0.0
    %143 = vmatprep.mubr.f32.mxu0 0.0
    %144 = vmatmul.mubr.f32.gmra.mrb[0].mxu0 %v44
    %v145 = vpop.f32.mrb[0].mxu0
    %v146 = vadd.f32 0.0, %v145
    %v147 = vpop.f32.mrb[0].mxu0
    %148 = vdwg.mxu0
    %v150 = vlaneseq
    %v151 = vshrl.u32 %v150, 7
    %v152 = vsub.s32 0, %v151
    %v153 = vrot.slane %v78, %v152
    %v155 = vmul.f32 %v153, %v146
    %156 = vmatprep.subr.mxu0 0.0
    %157 = vmatpush1.msra.mxu0 %v45
    %158 = vmatprep.subr.mxu0 0.0
    %159 = vmatpush1.msra.mxu0 %v46
    %160 = vmatprep.subr.mxu0 0.0
    %161 = vmatpush1.msra.mxu0 %v47
    %162 = vmatprep.subr.mxu0 0.0
    %163 = vmatpush1.msra.mxu0 %v48
    %164 = vmatprep.subr.mxu0 0.0
    %165 = vmatpush1.msra.mxu0 %v49
    %166 = vmatprep.subr.mxu0 0.0
    %167 = vmatpush1.msra.mxu0 %v50
    %168 = vmatprep.subr.mxu0 0.0
    %169 = vmatpush1.msra.mxu0 %v51
    %170 = vmatprep.subr.mxu0 0.0
    %171 = vmatpush1.msra.mxu0 %v52
    %172 = vmatprep.subr.mxu0 0.0
    %173 = vmatpush1.msra.mxu0 %v53
    %174 = vmatprep.subr.mxu0 0.0
    %175 = vmatpush1.msra.mxu0 %v54
    %176 = vmatprep.subr.mxu0 0.0
    %177 = vmatpush1.msra.mxu0 %v55
    %178 = vmatprep.subr.mxu0 0.0
    %179 = vmatpush1.msra.mxu0 %v56
    %180 = vmatprep.subr.mxu0 0.0
    %181 = vmatpush1.msra.mxu0 %v57
    %182 = vmatprep.subr.mxu0 0.0
    %183 = vmatpush1.msra.mxu0 %v58
    %184 = vmatprep.subr.mxu0 0.0
    %185 = vmatpush1.msra.mxu0 %v59
    %186 = vmatprep.subr.mxu0 0.0
    %187 = vmatpush1.msra.mxu0 %v60
    %188 = vmatprep.subr.mxu0 0.0
    %189 = vmatpush1.msra.mxu0 0.0
    %190 = vmatprep.subr.mxu0 0.0
    %191 = vmatpush1.msra.mxu0 0.0
    %192 = vmatprep.subr.mxu0 0.0
    %193 = vmatpush1.msra.mxu0 0.0
    %194 = vmatprep.subr.mxu0 0.0
    %195 = vmatpush1.msra.mxu0 0.0
    %196 = vmatprep.subr.mxu0 0.0
    %197 = vmatpush1.msra.mxu0 0.0
    %198 = vmatprep.subr.mxu0 0.0
    %199 = vmatpush1.msra.mxu0 0.0
    %200 = vmatprep.subr.mxu0 0.0
    %201 = vmatpush1.msra.mxu0 0.0
    %202 = vmatprep.subr.mxu0 0.0
    %203 = vmatpush1.msra.mxu0 0.0
    %204 = vmatprep.subr.mxu0 0.0
    %205 = vmatpush1.msra.mxu0 0.0
    %206 = vmatprep.subr.mxu0 0.0
    %207 = vmatpush1.msra.mxu0 0.0
    %208 = vmatprep.subr.mxu0 0.0
    %209 = vmatpush1.msra.mxu0 0.0
    %210 = vmatprep.subr.mxu0 0.0
    %211 = vmatpush1.msra.mxu0 0.0
    %212 = vmatprep.subr.mxu0 0.0
    %213 = vmatpush1.msra.mxu0 0.0
    %214 = vmatprep.subr.mxu0 0.0
    %215 = vmatpush1.msra.mxu0 0.0
    %216 = vmatprep.subr.mxu0 0.0
    %217 = vmatpush1.msra.mxu0 0.0
    %218 = vmatprep.subr.mxu0 0.0
    %219 = vmatpush1.msra.mxu0 0.0
    %220 = vmatprep.mubr.f32.mxu0 0.0
    %221 = vmatmul.mubr.f32.gmra.mrb[0].mxu0 %v36
    %v222 = vpop.f32.mrb[0].mxu0
    %v223 = vadd.f32 %v155, %v222
    %v224 = vpop.f32.mrb[0].mxu0
    %225 = vdwg.mxu0
    %v226 = vadd.f32 %v77, %v223
    %227 = vst [vmem:[#allocation2] sm:$0xff] %v226
    // Predicated region
    $region30: #{noisy_linear_forward.1} parent=1 // pred_check
      _
    $region31: #{noisy_linear_forward.1} parent=1 // pred_check_branch
      %229 = sbr.rel (0) target = $region33
    $region32: #{noisy_linear_forward.1} parent=1 // pred_region
      %s231 = ssub.s32 128, 128
      %232 = vsyncadd [#allocation3], %s231
      %s234 = sshll.u32 [#allocation2], 4
      %s235 = int_to_ptr.vmem [resolvable:$true] %s234
      %237 = dma.vmem_to_hbm [thread:$0]  %s235, 128, %s6, [#allocation3]
    $region33: #{noisy_linear_forward.1} parent=1 // pred_fallthru
      _
    // Predicated region
    $region34: #{noisy_linear_forward.1} parent=1 // pred_check
      _
    $region35: #{noisy_linear_forward.1} parent=1 // pred_check_branch
      %239 = sbr.rel (0) target = $region37
    $region36: #{noisy_linear_forward.1} parent=1 // pred_region
      %240 = dma.done [#allocation3], 128
    $region37: #{noisy_linear_forward.1} parent=1 // pred_fallthru
      _
    %241 = vsyncpa [#allocation3], 1

</llo_original>
